<compile_context>
chip_gen: v6e
topology: v6e:2x2x1
jax: 0.10.0
libtpu: 0.0.40
codegen_flags: <defaults>
</compile_context>

<pallas_src>
import jax
import jax.numpy as jnp
from jax.experimental import pallas as pl
from jax.experimental.pallas import tpu as pltpu

EPS = 1e-5


def _prediction_mlp_kernel(x_ref, w1_ref, g_ref, beta_ref, w2_ref, b2_ref,
                           o_ref, acc_ref):
    h_idx = pl.program_id(1)           # H (contraction) tile index — innermost

    @pl.when(h_idx == 0)
    def _():
        acc_ref[...] = jnp.zeros_like(acc_ref)

    # ---- Linear 1 (bias omitted: cancelled by the BN mean subtraction) ----
    # Operands kept in their input dtype (f32 or bf16); f32 accumulation.
    h = jnp.dot(x_ref[...], w1_ref[...], preferred_element_type=jnp.float32)

    # ---- BatchNorm1d (training-mode batch stats), affine folded to scale/shift ----
    mean = jnp.mean(h, axis=0, keepdims=True)            # (1, th)
    c = h - mean                                         # reused for variance
    var = jnp.mean(c * c, axis=0, keepdims=True)         # biased batch variance
    scale = jax.lax.rsqrt(var + EPS) * g_ref[...]        # tiny (1, th), rsqrt on EUP
    hr = jnp.maximum(c * scale + beta_ref[...], 0.0)     # ReLU

    # ---- Linear 2 partial sum along the H (contraction) axis ----
    acc_ref[...] += jnp.dot(hr.astype(w2_ref.dtype), w2_ref[...],
                            preferred_element_type=jnp.float32)

    @pl.when(h_idx == pl.num_programs(1) - 1)
    def _():
        o_ref[...] = (acc_ref[...] + b2_ref[...]).astype(o_ref.dtype)


def prediction_mlp(x, w1, b1, gamma, beta, w2, b2, *,
                   tile_h=256, tile_dout=256, matmul_dtype=None):
    """x: (B, D_in) -> (B, D_out).

    b1 is accepted to mirror nn.Linear(bias=True) but is mathematically inert:
    the BN mean subtraction cancels any pre-BN bias, so it is not shipped to
    the kernel.  Pass matmul_dtype=jnp.bfloat16 to feed the MXU bf16 operands
    (f32 accumulation, f32 BN math, output stays in x's original dtype).
    """
    del b1  # cancelled exactly by BatchNorm's mean subtraction

    B, d_in = x.shape
    H = w1.shape[1]
    d_out = w2.shape[1]
    out_dtype = x.dtype

    tile_h = min(tile_h, H)
    tile_dout = min(tile_dout, d_out)
    assert H % tile_h == 0 and d_out % tile_dout == 0, "tiles must divide dims"

    if matmul_dtype is not None:
        x = x.astype(matmul_dtype)
        w1 = w1.astype(matmul_dtype)
        w2 = w2.astype(matmul_dtype)

    gv = gamma.reshape(1, H).astype(jnp.float32)
    bv = beta.reshape(1, H).astype(jnp.float32)
    b2v = b2.reshape(1, d_out).astype(jnp.float32)

    grid = (d_out // tile_dout, H // tile_h)   # (parallel, arbitrary/reduction)

    return pl.pallas_call(
        _prediction_mlp_kernel,
        out_shape=jax.ShapeDtypeStruct((B, d_out), out_dtype),
        grid_spec=pltpu.PrefetchScalarGridSpec(
            num_scalar_prefetch=0,
            grid=grid,
            in_specs=[
                pl.BlockSpec((B, d_in),          lambda j, h: (0, 0)),  # x (resident)
                pl.BlockSpec((d_in, tile_h),     lambda j, h: (0, h)),  # w1
                pl.BlockSpec((1, tile_h),        lambda j, h: (0, h)),  # gamma
                pl.BlockSpec((1, tile_h),        lambda j, h: (0, h)),  # beta
                pl.BlockSpec((tile_h, tile_dout), lambda j, h: (h, j)), # w2
                pl.BlockSpec((1, tile_dout),     lambda j, h: (0, j)),  # b2
            ],
            out_specs=pl.BlockSpec((B, tile_dout), lambda j, h: (0, j)),
            scratch_shapes=[pltpu.VMEM((B, tile_dout), jnp.float32)],
        ),
        compiler_params=pltpu.CompilerParams(
            dimension_semantics=("parallel", "arbitrary")),
    )(x, w1, gv, bv, w2, b2v)


def _reference(x, w1, b1, gamma, beta, w2, b2):
    # Full PyTorch semantics (b1 included; its effect cancels inside BN).
    h = jnp.dot(x, w1, precision=jax.lax.Precision.HIGHEST) + b1
    mean = jnp.mean(h, axis=0, keepdims=True)
    var = jnp.mean((h - mean) ** 2, axis=0, keepdims=True)
    hn = (h - mean) / jnp.sqrt(var + EPS) * gamma + beta
    hr = jnp.maximum(hn, 0.0)
    return jnp.dot(hr, w2, precision=jax.lax.Precision.HIGHEST) + b2


if __name__ == "__main__":
    # Module-default feature sizes, small batch (multiple of 16 for bf16 packing).
    B, D_IN, HID, D_OUT = 16, 256, 512, 256

    key = jax.random.PRNGKey(0)
    kx, k1, kb1, k2, kb2 = jax.random.split(key, 5)

    x = jax.random.normal(kx, (B, D_IN), dtype=jnp.float32)

    lim1 = 1.0 / (D_IN ** 0.5)
    w1 = jax.random.uniform(k1, (D_IN, HID), minval=-lim1, maxval=lim1,
                            dtype=jnp.float32)
    b1 = jax.random.uniform(kb1, (HID,), minval=-lim1, maxval=lim1,
                            dtype=jnp.float32)
    gamma = jnp.ones((HID,), jnp.float32)   # BatchNorm1d default weight
    beta = jnp.zeros((HID,), jnp.float32)   # BatchNorm1d default bias
    lim2 = 1.0 / (HID ** 0.5)
    w2 = jax.random.uniform(k2, (HID, D_OUT), minval=-lim2, maxval=lim2,
                            dtype=jnp.float32)
    b2 = jax.random.uniform(kb2, (D_OUT,), minval=-lim2, maxval=lim2,
                            dtype=jnp.float32)

    ref = _reference(x, w1, b1, gamma, beta, w2, b2)

    # f32-operand path (tight check).
    out = jax.block_until_ready(prediction_mlp(x, w1, b1, gamma, beta, w2, b2))
    assert out.shape == (B, D_OUT)
    assert jnp.allclose(out, ref, atol=2e-4, rtol=2e-4), "f32 mismatch vs reference"

    # bf16-operand MXU fast path (loose check — bf16 mantissa, f32 accumulation).
    out_bf16 = jax.block_until_ready(
        prediction_mlp(x, w1, b1, gamma, beta, w2, b2, matmul_dtype=jnp.bfloat16))
    assert out_bf16.shape == (B, D_OUT)
    assert jnp.allclose(out_bf16, ref, atol=5e-2, rtol=5e-2), "bf16 mismatch vs reference"

    print("KERNEL_OK")
</pallas_src>

<mosaic_0001>
module attributes {stable_mosaic.version = 11 : i64} {
  func.func @_prediction_mlp_kernel(%arg0: i32, %arg1: i32, %arg2: memref<16x256xf32, #tpu.memory_space<vmem>>, %arg3: memref<256x256xf32, #tpu.memory_space<vmem>>, %arg4: memref<1x256xf32, #tpu.memory_space<vmem>>, %arg5: memref<1x256xf32, #tpu.memory_space<vmem>>, %arg6: memref<256x256xf32, #tpu.memory_space<vmem>>, %arg7: memref<1x256xf32, #tpu.memory_space<vmem>>, %arg8: memref<16x256xf32, #tpu.memory_space<vmem>>, %arg9: memref<16x256xf32, #tpu.memory_space<vmem>>) attributes {dimension_semantics = [#tpu.dimension_semantics<parallel>, #tpu.dimension_semantics<arbitrary>], iteration_bounds = array<i64: 1, 2>, scalar_prefetch = 0 : i64, scratch_operands = 1 : i64, tpu.core_type = #tpu.core_type<tc>, window_params = [{pipeline_mode = #tpu.pipeline_mode<synchronous>, transform_indices = @transform_0, window_bounds = array<i64: 16, 256>}, {transform_indices = @transform_1, window_bounds = array<i64: 256, 256>}, {transform_indices = @transform_2, window_bounds = array<i64: 1, 256>}, {transform_indices = @transform_3, window_bounds = array<i64: 1, 256>}, {transform_indices = @transform_4, window_bounds = array<i64: 256, 256>}, {transform_indices = @transform_5, window_bounds = array<i64: 1, 256>}, {transform_indices = @transform_6, window_bounds = array<i64: 16, 256>}]} {
    %c0_i32 = arith.constant 0 : i32
    %0 = arith.cmpi eq, %arg1, %c0_i32 : i32
    %1 = arith.extui %0 : i1 to i32
    %c0_i32_0 = arith.constant 0 : i32
    %2 = arith.cmpi ne, %1, %c0_i32_0 : i32
    scf.if %2 {
      %cst_22 = arith.constant 0.000000e+00 : f32
      %37 = vector.broadcast %cst_22 : f32 to vector<16x256xf32>
      %c0_23 = arith.constant 0 : index
      %c0_24 = arith.constant 0 : index
      %38 = vector.load %arg9[%c0_23, %c0_24] : memref<16x256xf32, #tpu.memory_space<vmem>>, vector<16x256xf32>
      tpu.vector_store %arg9[%c0_23, %c0_24], %37 {strides = array<i32>} : memref<16x256xf32, #tpu.memory_space<vmem>>, vector<16x256xf32>,
    } else {
    }
    %c0 = arith.constant 0 : index
    %c0_1 = arith.constant 0 : index
    %3 = vector.load %arg2[%c0, %c0_1] : memref<16x256xf32, #tpu.memory_space<vmem>>, vector<16x256xf32>
    %c0_2 = arith.constant 0 : index
    %c0_3 = arith.constant 0 : index
    %4 = vector.load %arg3[%c0_2, %c0_3] : memref<256x256xf32, #tpu.memory_space<vmem>>, vector<256x256xf32>
    %cst = arith.constant dense<0.000000e+00> : vector<16x256xf32>
    %5 = tpu.matmul %3, %4, %cst {dimension_numbers = #tpu.dot_dimension_numbers<[1], [0], [0], [1], [0, 0, 1, 1], [], []>} : vector<16x256xf32>, vector<256x256xf32>, vector<16x256xf32> -> vector<16x256xf32>
    %cst_4 = arith.constant dense<0.000000e+00> : vector<256xf32>
    %6 = vector.multi_reduction <add>, %5, %cst_4 [0] : vector<16x256xf32> to vector<256xf32>
    %7 = vector.shape_cast %6 : vector<256xf32> to vector<1x256xf32>
    %cst_5 = arith.constant 1.600000e+01 : f32
    %8 = vector.broadcast %cst_5 : f32 to vector<1x256xf32>
    %9 = arith.divf %7, %8 : vector<1x256xf32>
    %10 = vector.broadcast %9 : vector<1x256xf32> to vector<16x256xf32>
    %11 = arith.subf %5, %10 : vector<16x256xf32>
    %12 = arith.mulf %11, %11 : vector<16x256xf32>
    %cst_6 = arith.constant dense<0.000000e+00> : vector<256xf32>
    %13 = vector.multi_reduction <add>, %12, %cst_6 [0] : vector<16x256xf32> to vector<256xf32>
    %14 = vector.shape_cast %13 : vector<256xf32> to vector<1x256xf32>
    %cst_7 = arith.constant 1.600000e+01 : f32
    %15 = vector.broadcast %cst_7 : f32 to vector<1x256xf32>
    %16 = arith.divf %14, %15 : vector<1x256xf32>
    %cst_8 = arith.constant 9.99999974E-6 : f32
    %17 = vector.broadcast %cst_8 : f32 to vector<1x256xf32>
    %18 = arith.addf %16, %17 : vector<1x256xf32>
    %19 = math.rsqrt %18 : vector<1x256xf32>
    %c0_9 = arith.constant 0 : index
    %c0_10 = arith.constant 0 : index
    %20 = vector.load %arg4[%c0_9, %c0_10] : memref<1x256xf32, #tpu.memory_space<vmem>>, vector<1x256xf32>
    %21 = arith.mulf %19, %20 : vector<1x256xf32>
    %22 = vector.broadcast %21 : vector<1x256xf32> to vector<16x256xf32>
    %23 = arith.mulf %11, %22 : vector<16x256xf32>
    %c0_11 = arith.constant 0 : index
    %c0_12 = arith.constant 0 : index
    %24 = vector.load %arg5[%c0_11, %c0_12] : memref<1x256xf32, #tpu.memory_space<vmem>>, vector<1x256xf32>
    %25 = vector.broadcast %24 : vector<1x256xf32> to vector<16x256xf32>
    %26 = arith.addf %23, %25 : vector<16x256xf32>
    %cst_13 = arith.constant 0.000000e+00 : f32
    %27 = vector.broadcast %cst_13 : f32 to vector<16x256xf32>
    %28 = arith.maximumf %26, %27 : vector<16x256xf32>
    %c0_14 = arith.constant 0 : index
    %c0_15 = arith.constant 0 : index
    %29 = vector.load %arg9[%c0_14, %c0_15] : memref<16x256xf32, #tpu.memory_space<vmem>>, vector<16x256xf32>
    %c0_16 = arith.constant 0 : index
    %c0_17 = arith.constant 0 : index
    %30 = vector.load %arg6[%c0_16, %c0_17] : memref<256x256xf32, #tpu.memory_space<vmem>>, vector<256x256xf32>
    %cst_18 = arith.constant dense<0.000000e+00> : vector<16x256xf32>
    %31 = tpu.matmul %28, %30, %cst_18 {dimension_numbers = #tpu.dot_dimension_numbers<[1], [0], [0], [1], [0, 0, 1, 1], [], []>} : vector<16x256xf32>, vector<256x256xf32>, vector<16x256xf32> -> vector<16x256xf32>
    %32 = arith.addf %29, %31 : vector<16x256xf32>
    %c0_19 = arith.constant 0 : index
    %c0_20 = arith.constant 0 : index
    %33 = vector.load %arg9[%c0_19, %c0_20] : memref<16x256xf32, #tpu.memory_space<vmem>>, vector<16x256xf32>
    tpu.vector_store %arg9[%c0_19, %c0_20], %32 {strides = array<i32>} : memref<16x256xf32, #tpu.memory_space<vmem>>, vector<16x256xf32>,
    %c1_i32 = arith.constant 1 : i32
    %34 = arith.cmpi eq, %arg1, %c1_i32 : i32
    %35 = arith.extui %34 : i1 to i32
    %c0_i32_21 = arith.constant 0 : i32
    %36 = arith.cmpi ne, %35, %c0_i32_21 : i32
    scf.if %36 {
      %c0_22 = arith.constant 0 : index
      %c0_23 = arith.constant 0 : index
      %37 = vector.load %arg9[%c0_22, %c0_23] : memref<16x256xf32, #tpu.memory_space<vmem>>, vector<16x256xf32>
      %c0_24 = arith.constant 0 : index
      %c0_25 = arith.constant 0 : index
      %38 = vector.load %arg7[%c0_24, %c0_25] : memref<1x256xf32, #tpu.memory_space<vmem>>, vector<1x256xf32>
      %39 = vector.broadcast %38 : vector<1x256xf32> to vector<16x256xf32>
      %40 = arith.addf %37, %39 : vector<16x256xf32>
      %c0_26 = arith.constant 0 : index
      %c0_27 = arith.constant 0 : index
      %41 = vector.load %arg8[%c0_26, %c0_27] : memref<16x256xf32, #tpu.memory_space<vmem>>, vector<16x256xf32>
      tpu.vector_store %arg8[%c0_26, %c0_27], %40 {strides = array<i32>} : memref<16x256xf32, #tpu.memory_space<vmem>>, vector<16x256xf32>,
    } else {
    }
    return
  }
  func.func @transform_0(%arg0: i32, %arg1: i32) -> (i32, i32) {
    %c0_i32 = arith.constant 0 : i32
    %c0_i32_0 = arith.constant 0 : i32
    %c0_i32_1 = arith.constant 0 : i32
    return %c0_i32, %c0_i32_0 : i32, i32
  }
  func.func @transform_1(%arg0: i32, %arg1: i32) -> (i32, i32) {
    %c0_i32 = arith.constant 0 : i32
    %c0_i32_0 = arith.constant 0 : i32
    return %c0_i32, %arg1 : i32, i32
  }
  func.func @transform_2(%arg0: i32, %arg1: i32) -> (i32, i32) {
    %c0_i32 = arith.constant 0 : i32
    %c0_i32_0 = arith.constant 0 : i32
    return %c0_i32, %arg1 : i32, i32
  }
  func.func @transform_3(%arg0: i32, %arg1: i32) -> (i32, i32) {
    %c0_i32 = arith.constant 0 : i32
    %c0_i32_0 = arith.constant 0 : i32
    return %c0_i32, %arg1 : i32, i32
  }
  func.func @transform_4(%arg0: i32, %arg1: i32) -> (i32, i32) {
    %c0_i32 = arith.constant 0 : i32
    return %arg1, %arg0 : i32, i32
  }
  func.func @transform_5(%arg0: i32, %arg1: i32) -> (i32, i32) {
    %c0_i32 = arith.constant 0 : i32
    %c0_i32_0 = arith.constant 0 : i32
    return %c0_i32, %arg0 : i32, i32
  }
  func.func @transform_6(%arg0: i32, %arg1: i32) -> (i32, i32) {
    %c0_i32 = arith.constant 0 : i32
    %c0_i32_0 = arith.constant 0 : i32
    return %c0_i32, %arg0 : i32, i32
  }
}

</mosaic_0001>

<llo_original>
// kernel: tpu_custom_call.1
$region0: #{tpu_custom_call.1}
  #allocation0 [shape = 'u32[]', space=smem, size = 0x4, offset = 0x4, fixed_abs, tag = 'smem constant byte address 0x4 - core index']
  #allocation1 [shape = 'u32[144,128]{1,0:T(1,128)}', space=vmem, size = 0x12000, scoped, tag = 'internal scratch']
  #allocation2 [shape = 'f32[16,256]{1,0:T(8,128)}', space=vmem, size = 0x4000, scoped, tag = 'scratch operand']
  %s0 = inlined_call_operand.hbm [shape: f32[16,256], index: 0, kind: input, shape index: {}]
  %s1 = inlined_call_operand.hbm [shape: f32[256,512], index: 1, kind: input, shape index: {}]
  %s2 = inlined_call_operand.hbm [shape: f32[1,512], index: 2, kind: input, shape index: {}]
  %s3 = inlined_call_operand.vmem [shape: f32[1,512], index: 3, kind: input, shape index: {}]
  %s4 = inlined_call_operand.hbm [shape: f32[512,256], index: 4, kind: input, shape index: {}]
  %s5 = inlined_call_operand.vmem [shape: f32[1,256], index: 5, kind: input, shape index: {}]
  %s6 = inlined_call_operand.hbm [shape: f32[16,256], index: 6, kind: output, shape index: {}]
  %s7 = sld [smem:[#allocation0]]
  $region81: #{tpu_custom_call.1} parent=0
    _
  %s9 = ssub.s32 1, %s7
  %s10 = scalar_select 0, %s9, %s7
  $region1: #{tpu_custom_call.1} parent=0
    #allocation3 [shape = 'u8[16384]{0}', space=vmem, size = 0x4000, scoped, tag = 'input window, operand 0, single buffered']
    #allocation4 [shape = 's32[2]{0}', space=sflag, size = 0x8, scoped, tag = 'scoped memory for tpu_custom_call.1']
    #allocation5 [shape = 's32[2]{0}', space=sflag, size = 0x8, scoped, tag = 'scoped memory for tpu_custom_call.1']
    #allocation6 [shape = 'u8[524288]{0}', space=vmem, size = 0x80000, scoped, tag = 'input window, operand 1']
    #allocation7 [shape = 's32[2]{0}', space=sflag, size = 0x8, scoped, tag = 'scoped memory for tpu_custom_call.1']
    #allocation8 [shape = 'u8[2048]{0}', space=vmem, size = 0x800, scoped, tag = 'input window, operand 2']
    #allocation9 [shape = 'u8[524288]{0}', space=vmem, size = 0x80000, scoped, tag = 'input window, operand 4']
    #allocation10 [shape = 's32[2]{0}', space=sflag, size = 0x8, scoped, tag = 'scoped memory for tpu_custom_call.1']
    #allocation11 [shape = 'u8[16384]{0}', space=vmem, size = 0x4000, scoped, tag = 'output window, operand 0, single buffered']
    %11 = vsyncpa [#allocation4], 0
    %12 = vsyncpa [#allocation7], 0
    %s13 = scalar_lea.sflag [#allocation7], 1
    %14 = vsyncpa %s13, 0
    %15 = vsyncpa [#allocation10], 0
    %s16 = scalar_lea.sflag [#allocation10], 1
    %17 = vsyncpa %s16, 0
    %18 = vsyncpa [#allocation5], 0
    loop: start=0, step=1, limit=4
    $region2: #{tpu_custom_call.1} parent=1 // loop_pre_header
      _
    $region3: #{tpu_custom_call.1} parent=1 // loop_header
      %s20 = sphi 0, %s24
      %p21 = scmp.ge.s32.totalorder %s20, 4
      %s27 = sphi 0, %s39
      %s28 = sphi 0, %s35
      %s29 = sphi 0, %s27
      %s30 = sphi 0, %s28
      %s31 = sphi 0, %s29
      %s32 = sphi 0, %s30
      %s40 = sphi 0, %s40
      %s42 = sphi 0, %s40
      %s43 = sphi 0, %s42
      %s57 = sphi 0, %s43
      %s63 = sphi 0, %s65
      %s66 = sphi 0, %s63
      %s67 = sphi 0, %s66
      %s83 = sphi 0, %s67
      %s89 = sphi 0, %s91
      %s92 = sphi 0, %s89
      %s93 = sphi 0, %s92
      %s109 = sphi 0, %s93
      %s115 = sphi 0, %s117
      %s118 = sphi 0, %s115
      %s119 = sphi 0, %s118
      %s135 = sphi 0, %s119
      %s143 = sphi 0, %s145
      %s146 = sphi 0, %s143
      %s147 = sphi 0, %s146
      %s163 = sphi 0, %s147
      %s169 = sphi 0, %s171
      %s172 = sphi 0, %s169
      %s173 = sphi 0, %s172
      %s189 = sphi 0, %s173
      %s195 = sphi 0, %s197
      %s198 = sphi 0, %s195
      %s199 = sphi 0, %s198
      %s215 = sphi 0, %s199
    $region4: #{tpu_custom_call.1} parent=1 // loop_header_branch
      %23 = sbr.rel (%p21) target = $region8
    $region5: #{tpu_custom_call.1} parent=1 // loop_body
      %s25 = ssub.s32 %s20, 1
      %s26 = ssub.s32 %s20, 2
      %s33 = sadd.s32 1, %s28
      %p34 = scmp.ge.s32.totalorder %s33, 2
      %s35 = scalar_select %p34, 0, %s33
      %s36 = sadd.s32 1, %s27
      %s37 = scalar_select %p34, %s36, %s27
      %p38 = scmp.ge.s32.totalorder %s37, 1
      %s39 = scalar_select %p38, 0, %s37
      %s41 = sadd.s32 %s40, 1
      %p44 = scmp.eq.s32.totalorder %s20, 1
      %p45 = scmp.ne.s32.totalorder %s40, %s42
      %p46 = scmp.eq.s32.totalorder %s20, 0
      %p47 = por %p45, %p46
      %p48 = scmp.ne.s32.totalorder %s40, %s42
      %p49 = scmp.eq.s32.totalorder %s25, 1
      %p50 = por %p48, %p49
      %p51 = scmp.ne.s32.totalorder %s42, %s43
      %p52 = scmp.eq.s32.totalorder %s25, 0
      %p53 = por %p51, %p52
      %p54 = scmp.ne.s32.totalorder %s42, %s43
      %p55 = scmp.eq.s32.totalorder %s26, 1
      %p56 = por %p54, %p55
      %p58 = scmp.ne.s32.totalorder %s43, %s57
      %p59 = scmp.eq.s32.totalorder %s26, 0
      %p60 = por %p58, %p59
      %s61 = ssub.s32 %s28, %s35
      %p62 = scmp.eq.s32.totalorder %s61, 0
      %s64 = sadd.s32 %s63, 1
      %s65 = scalar_select %p62, %s63, %s64
      %p68 = pneg %p62
      %p69 = scmp.eq.s32.totalorder %s20, 1
      %p70 = por %p68, %p69
      %p71 = scmp.ne.s32.totalorder %s63, %s66
      %p72 = scmp.eq.s32.totalorder %s20, 0
      %p73 = por %p71, %p72
      %p74 = scmp.ne.s32.totalorder %s63, %s66
      %p75 = scmp.eq.s32.totalorder %s25, 1
      %p76 = por %p74, %p75
      %p77 = scmp.ne.s32.totalorder %s66, %s67
      %p78 = scmp.eq.s32.totalorder %s25, 0
      %p79 = por %p77, %p78
      %p80 = scmp.ne.s32.totalorder %s66, %s67
      %p81 = scmp.eq.s32.totalorder %s26, 1
      %p82 = por %p80, %p81
      %p84 = scmp.ne.s32.totalorder %s67, %s83
      %p85 = scmp.eq.s32.totalorder %s26, 0
      %p86 = por %p84, %p85
      %s87 = ssub.s32 %s28, %s35
      %p88 = scmp.eq.s32.totalorder %s87, 0
      %s90 = sadd.s32 %s89, 1
      %s91 = scalar_select %p88, %s89, %s90
      %p94 = pneg %p88
      %p95 = scmp.eq.s32.totalorder %s20, 1
      %p96 = por %p94, %p95
      %p97 = scmp.ne.s32.totalorder %s89, %s92
      %p98 = scmp.eq.s32.totalorder %s20, 0
      %p99 = por %p97, %p98
      %p100 = scmp.ne.s32.totalorder %s89, %s92
      %p101 = scmp.eq.s32.totalorder %s25, 1
      %p102 = por %p100, %p101
      %p103 = scmp.ne.s32.totalorder %s92, %s93
      %p104 = scmp.eq.s32.totalorder %s25, 0
      %p105 = por %p103, %p104
      %p106 = scmp.ne.s32.totalorder %s92, %s93
      %p107 = scmp.eq.s32.totalorder %s26, 1
      %p108 = por %p106, %p107
      %p110 = scmp.ne.s32.totalorder %s93, %s109
      %p111 = scmp.eq.s32.totalorder %s26, 0
      %p112 = por %p110, %p111
      %s113 = ssub.s32 %s28, %s35
      %p114 = scmp.eq.s32.totalorder %s113, 0
      %s116 = sadd.s32 %s115, 1
      %s117 = scalar_select %p114, %s115, %s116
      %p120 = pneg %p114
      %p121 = scmp.eq.s32.totalorder %s20, 1
      %p122 = por %p120, %p121
      %p123 = scmp.ne.s32.totalorder %s115, %s118
      %p124 = scmp.eq.s32.totalorder %s20, 0
      %p125 = por %p123, %p124
      %p126 = scmp.ne.s32.totalorder %s115, %s118
      %p127 = scmp.eq.s32.totalorder %s25, 1
      %p128 = por %p126, %p127
      %p129 = scmp.ne.s32.totalorder %s118, %s119
      %p130 = scmp.eq.s32.totalorder %s25, 0
      %p131 = por %p129, %p130
      %p132 = scmp.ne.s32.totalorder %s118, %s119
      %p133 = scmp.eq.s32.totalorder %s26, 1
      %p134 = por %p132, %p133
      %p136 = scmp.ne.s32.totalorder %s119, %s135
      %p137 = scmp.eq.s32.totalorder %s26, 0
      %p138 = por %p136, %p137
      %s139 = ssub.s32 %s28, %s35
      %s140 = ssub.s32 %s27, %s39
      %s141 = sor.u32 %s139, %s140
      %p142 = scmp.eq.s32.totalorder %s141, 0
      %s144 = sadd.s32 %s143, 1
      %s145 = scalar_select %p142, %s143, %s144
      %p148 = pneg %p142
      %p149 = scmp.eq.s32.totalorder %s20, 1
      %p150 = por %p148, %p149
      %p151 = scmp.ne.s32.totalorder %s143, %s146
      %p152 = scmp.eq.s32.totalorder %s20, 0
      %p153 = por %p151, %p152
      %p154 = scmp.ne.s32.totalorder %s143, %s146
      %p155 = scmp.eq.s32.totalorder %s25, 1
      %p156 = por %p154, %p155
      %p157 = scmp.ne.s32.totalorder %s146, %s147
      %p158 = scmp.eq.s32.totalorder %s25, 0
      %p159 = por %p157, %p158
      %p160 = scmp.ne.s32.totalorder %s146, %s147
      %p161 = scmp.eq.s32.totalorder %s26, 1
      %p162 = por %p160, %p161
      %p164 = scmp.ne.s32.totalorder %s147, %s163
      %p165 = scmp.eq.s32.totalorder %s26, 0
      %p166 = por %p164, %p165
      %s167 = ssub.s32 %s27, %s39
      %p168 = scmp.eq.s32.totalorder %s167, 0
      %s170 = sadd.s32 %s169, 1
      %s171 = scalar_select %p168, %s169, %s170
      %p174 = pneg %p168
      %p175 = scmp.eq.s32.totalorder %s20, 1
      %p176 = por %p174, %p175
      %p177 = scmp.ne.s32.totalorder %s169, %s172
      %p178 = scmp.eq.s32.totalorder %s20, 0
      %p179 = por %p177, %p178
      %p180 = scmp.ne.s32.totalorder %s169, %s172
      %p181 = scmp.eq.s32.totalorder %s25, 1
      %p182 = por %p180, %p181
      %p183 = scmp.ne.s32.totalorder %s172, %s173
      %p184 = scmp.eq.s32.totalorder %s25, 0
      %p185 = por %p183, %p184
      %p186 = scmp.ne.s32.totalorder %s172, %s173
      %p187 = scmp.eq.s32.totalorder %s26, 1
      %p188 = por %p186, %p187
      %p190 = scmp.ne.s32.totalorder %s173, %s189
      %p191 = scmp.eq.s32.totalorder %s26, 0
      %p192 = por %p190, %p191
      %s193 = ssub.s32 %s27, %s39
      %p194 = scmp.eq.s32.totalorder %s193, 0
      %s196 = sadd.s32 %s195, 1
      %s197 = scalar_select %p194, %s195, %s196
      %p200 = pneg %p194
      %p201 = scmp.eq.s32.totalorder %s20, 1
      %p202 = por %p200, %p201
      %p203 = scmp.ne.s32.totalorder %s195, %s198
      %p204 = scmp.eq.s32.totalorder %s20, 0
      %p205 = por %p203, %p204
      %p206 = scmp.ne.s32.totalorder %s195, %s198
      %p207 = scmp.eq.s32.totalorder %s25, 1
      %p208 = por %p206, %p207
      %p209 = scmp.ne.s32.totalorder %s198, %s199
      %p210 = scmp.eq.s32.totalorder %s25, 0
      %p211 = por %p209, %p210
      %p212 = scmp.ne.s32.totalorder %s198, %s199
      %p213 = scmp.eq.s32.totalorder %s26, 1
      %p214 = por %p212, %p213
      %p216 = scmp.ne.s32.totalorder %s199, %s215
      %p217 = scmp.eq.s32.totalorder %s26, 0
      %p218 = por %p216, %p217
      %p219 = scmp.le.s32.totalorder 1, %s20
      %p220 = scmp.lt.s32.totalorder %s20, 3
      %p221 = pnand %p219, %p220
      %p222 = pneg %p221
      // Predicated region
      $region9: #{tpu_custom_call.1} parent=5 // pred_check
        _
      $region10: #{tpu_custom_call.1} parent=5 // pred_check_branch
        %224 = sbr.rel (%p221) target = $region12
      $region11: #{tpu_custom_call.1} parent=5 // pred_region
        %s225 = ssub.s32 %s20, 1
        // Predicated region
        $region13: #{tpu_custom_call.1} parent=11 // pred_check
          %p226 = pneg %p53
        $region14: #{tpu_custom_call.1} parent=11 // pred_check_branch
          %228 = sbr.rel (%p226) target = $region16
        $region15: #{tpu_custom_call.1} parent=11 // pred_region
          %s230 = ssub.s32 512, 512
          %231 = vsyncadd [#allocation4], %s230
          %s232 = sshll.u32 [#allocation3], 4
          %s233 = int_to_ptr.vmem [resolvable:$true] %s232
          %238 = dma.hbm_to_vmem [thread:$0]  %s0, 512, %s233, [#allocation4], 256, 256, 16
        $region16: #{tpu_custom_call.1} parent=11 // pred_fallthru
          _
        // Predicated region
        $region17: #{tpu_custom_call.1} parent=11 // pred_check
          %p239 = pneg %p185
        $region18: #{tpu_custom_call.1} parent=11 // pred_check_branch
          %241 = sbr.rel (%p239) target = $region20
        $region19: #{tpu_custom_call.1} parent=11 // pred_region
          %s242 = smul.u32 2, %s29
          %p243 = scmp.lt.s32.totalorder %s242, 1
          %s244 = scalar_select %p243, %s242, 1
          %s245 = scalar_lea.vmem %s5, %s244
          %s246 = smul.u32 2, %s29
        $region20: #{tpu_custom_call.1} parent=11 // pred_fallthru
          _
      $region12: #{tpu_custom_call.1} parent=5 // pred_fallthru
        _
      %p247 = scmp.lt.s32.totalorder %s20, 2
      // Predicated region
      $region21: #{tpu_custom_call.1} parent=5 // pred_check
        %p248 = pneg %p247
      $region22: #{tpu_custom_call.1} parent=5 // pred_check_branch
        %250 = sbr.rel (%p248) target = $region24
      $region23: #{tpu_custom_call.1} parent=5 // pred_region
        // Predicated region
        $region25: #{tpu_custom_call.1} parent=23 // pred_check
          %p251 = pneg %p73
        $region26: #{tpu_custom_call.1} parent=23 // pred_check_branch
          %253 = sbr.rel (%p251) target = $region28
        $region27: #{tpu_custom_call.1} parent=23 // pred_region
          %s254 = sand.u32 %s20, 1
          %s255 = scalar_lea.sflag [#allocation7], %s254
          %s256 = sand.u32 %s63, 1
          %s257 = smul.addr %s256, 512
          %s258 = scalar_lea.vmem [#allocation6], %s257
          %s259 = smul.u32 2, %s28
          %s261 = ssub.s32 8192, 8192
          %262 = vsyncadd %s255, %s261
          %s263 = smul.addr %s259, 128
          %s264 = scalar_lea.hbm %s1, %s263
          %s265 = sshll.u32 %s258, 4
          %s266 = int_to_ptr.vmem [resolvable:$true] %s265
          %271 = dma.hbm_to_vmem [thread:$0]  %s264, 8192, %s266, %s255, 512, 256, 16
        $region28: #{tpu_custom_call.1} parent=23 // pred_fallthru
          _
        // Predicated region
        $region29: #{tpu_custom_call.1} parent=23 // pred_check
          %p272 = pneg %p99
        $region30: #{tpu_custom_call.1} parent=23 // pred_check_branch
          %274 = sbr.rel (%p272) target = $region32
        $region31: #{tpu_custom_call.1} parent=23 // pred_region
          %s275 = sand.u32 %s20, 1
          %s276 = scalar_lea.sflag [#allocation7], %s275
          %s277 = sand.u32 %s89, 1
          %s278 = smul.addr %s277, 2
          %s279 = scalar_lea.vmem [#allocation8], %s278
          %s280 = smul.u32 2, %s28
          %s282 = ssub.s32 32, 32
          %283 = vsyncadd %s276, %s282
          %s284 = smul.addr %s280, 16
          %s285 = scalar_lea.hbm %s2, %s284
          %s287 = sshll.u32 %s279, 4
          %s288 = int_to_ptr.vmem [resolvable:$true] %s287
          %290 = dma.hbm_to_vmem [thread:$0]  %s285, 32, %s288, %s276
        $region32: #{tpu_custom_call.1} parent=23 // pred_fallthru
          _
        // Predicated region
        $region33: #{tpu_custom_call.1} parent=23 // pred_check
          %p291 = pneg %p125
        $region34: #{tpu_custom_call.1} parent=23 // pred_check_branch
          %293 = sbr.rel (%p291) target = $region36
        $region35: #{tpu_custom_call.1} parent=23 // pred_region
          %s294 = smul.u32 2, %s28
          %p295 = scmp.lt.s32.totalorder %s294, 3
          %s296 = scalar_select %p295, %s294, 3
          %s297 = scalar_lea.vmem %s3, %s296
          %s298 = smul.u32 2, %s28
        $region36: #{tpu_custom_call.1} parent=23 // pred_fallthru
          _
        // Predicated region
        $region37: #{tpu_custom_call.1} parent=23 // pred_check
          %p299 = pneg %p153
        $region38: #{tpu_custom_call.1} parent=23 // pred_check_branch
          %301 = sbr.rel (%p299) target = $region40
        $region39: #{tpu_custom_call.1} parent=23 // pred_region
          %s302 = sand.u32 %s143, 1
          %s303 = scalar_lea.sflag [#allocation10], %s302
          %s304 = sand.u32 %s143, 1
          %s305 = smul.addr %s304, 512
          %s306 = scalar_lea.vmem [#allocation9], %s305
          %s307 = smul.u32 32, %s28
          %s308 = smul.u32 2, %s27
          %s310 = ssub.s32 8192, 8192
          %311 = vsyncadd %s303, %s310
          %s312 = smul.addr %s307, 2
          %s313 = sadd.s32 %s308, %s312
          %s314 = smul.addr %s313, 128
          %s315 = scalar_lea.hbm %s4, %s314
          %s316 = sshll.u32 %s306, 4
          %s317 = int_to_ptr.vmem [resolvable:$true] %s316
          %322 = dma.hbm_to_vmem [thread:$0]  %s315, 8192, %s317, %s303, 256, 256, 16
        $region40: #{tpu_custom_call.1} parent=23 // pred_fallthru
          _
      $region24: #{tpu_custom_call.1} parent=5 // pred_fallthru
        _
      %p323 = scmp.le.s32.totalorder 1, %s20
      %p324 = scmp.lt.s32.totalorder %s20, 3
      %p325 = pnand %p323, %p324
      %p326 = pneg %p325
      // Predicated region
      $region41: #{tpu_custom_call.1} parent=5 // pred_check
        _
      $region42: #{tpu_custom_call.1} parent=5 // pred_check_branch
        %328 = sbr.rel (%p325) target = $region44
      $region43: #{tpu_custom_call.1} parent=5 // pred_region
        %s329 = ssub.s32 %s20, 1
        // Predicated region
        $region45: #{tpu_custom_call.1} parent=43 // pred_check
          %p330 = pneg %p53
        $region46: #{tpu_custom_call.1} parent=43 // pred_check_branch
          %332 = sbr.rel (%p330) target = $region48
        $region47: #{tpu_custom_call.1} parent=43 // pred_region
          %333 = dma.done [#allocation4], 512
        $region48: #{tpu_custom_call.1} parent=43 // pred_fallthru
          _
        %s334 = sand.u32 %s25, 1
        %s335 = scalar_lea.sflag [#allocation7], %s334
        %s336 = sand.u32 %s66, 1
        %s337 = smul.addr %s336, 512
        %s338 = scalar_lea.vmem [#allocation6], %s337
        // Predicated region
        $region49: #{tpu_custom_call.1} parent=43 // pred_check
          %p339 = pneg %p79
        $region50: #{tpu_custom_call.1} parent=43 // pred_check_branch
          %341 = sbr.rel (%p339) target = $region52
        $region51: #{tpu_custom_call.1} parent=43 // pred_region
          %342 = dma.done %s335, 8192
        $region52: #{tpu_custom_call.1} parent=43 // pred_fallthru
          _
        %s343 = sand.u32 %s25, 1
        %s344 = scalar_lea.sflag [#allocation7], %s343
        %s345 = sand.u32 %s92, 1
        %s346 = smul.addr %s345, 2
        %s347 = scalar_lea.vmem [#allocation8], %s346
        // Predicated region
        $region53: #{tpu_custom_call.1} parent=43 // pred_check
          %p348 = pneg %p105
        $region54: #{tpu_custom_call.1} parent=43 // pred_check_branch
          %350 = sbr.rel (%p348) target = $region56
        $region55: #{tpu_custom_call.1} parent=43 // pred_region
          %351 = dma.done %s344, 32
        $region56: #{tpu_custom_call.1} parent=43 // pred_fallthru
          _
        %s352 = sand.u32 %s146, 1
        %s353 = scalar_lea.sflag [#allocation10], %s352
        %s354 = sand.u32 %s146, 1
        %s355 = smul.addr %s354, 512
        %s356 = scalar_lea.vmem [#allocation9], %s355
        // Predicated region
        $region57: #{tpu_custom_call.1} parent=43 // pred_check
          %p357 = pneg %p159
        $region58: #{tpu_custom_call.1} parent=43 // pred_check_branch
          %359 = sbr.rel (%p357) target = $region60
        $region59: #{tpu_custom_call.1} parent=43 // pred_region
          %360 = dma.done %s353, 8192
        $region60: #{tpu_custom_call.1} parent=43 // pred_fallthru
          _
        %p361 = pneg %p53
        %p362 = pneg %p50
        %s363 = sand.u32 %s25, 1
        %s364 = scalar_lea.sflag [#allocation7], %s363
        %s365 = sand.u32 %s66, 1
        %s366 = smul.addr %s365, 512
        %s367 = scalar_lea.vmem [#allocation6], %s366
        %p368 = pneg %p79
        %p369 = pneg %p76
        %s370 = sand.u32 %s25, 1
        %s371 = scalar_lea.sflag [#allocation7], %s370
        %s372 = sand.u32 %s92, 1
        %s373 = smul.addr %s372, 2
        %s374 = scalar_lea.vmem [#allocation8], %s373
        %p375 = pneg %p105
        %p376 = pneg %p102
        %s377 = smul.u32 2, %s30
        %p378 = scmp.lt.s32.totalorder %s377, 3
        %s379 = scalar_select %p378, %s377, 3
        %s380 = scalar_lea.vmem %s3, %s379
        %p381 = pneg %p131
        %p382 = pneg %p128
        %s383 = sand.u32 %s146, 1
        %s384 = scalar_lea.sflag [#allocation10], %s383
        %s385 = sand.u32 %s146, 1
        %s386 = smul.addr %s385, 512
        %s387 = scalar_lea.vmem [#allocation9], %s386
        %p388 = pneg %p159
        %p389 = pneg %p156
        %s390 = smul.u32 2, %s29
        %p391 = scmp.lt.s32.totalorder %s390, 1
        %s392 = scalar_select %p391, %s390, 1
        %s393 = scalar_lea.vmem %s5, %s392
        %p394 = pneg %p185
        %p395 = pneg %p182
        %p396 = pneg %p211
        %p397 = pneg %p208
        %s398 = smul.u32 2, %s30
        %s399 = smul.u32 2, %s30
        %s400 = smul.u32 2, %s30
        %p401 = scmp.lt.s32.totalorder %s400, 3
        %s402 = scalar_select %p401, %s400, 3
        %s403 = scalar_lea.vmem %s3, %s402
        %s404 = smul.u32 2, %s30
        %s405 = smul.u32 32, %s30
        %s406 = smul.u32 2, %s29
        %s407 = smul.u32 2, %s29
        %p408 = scmp.lt.s32.totalorder %s407, 1
        %s409 = scalar_select %p408, %s407, 1
        %s410 = scalar_lea.vmem %s5, %s409
        %s411 = smul.u32 2, %s29
        %s412 = smul.u32 2, %s29
        %p413 = scmp.eq.s32.totalorder %s30, 0
        // Predicated region
        $region61: #{tpu_custom_call.1} parent=43 // pred_check
          %p414 = pneg %p413
        $region62: #{tpu_custom_call.1} parent=43 // pred_check_branch
          %416 = sbr.rel (%p414) target = $region64
        $region63: #{tpu_custom_call.1} parent=43 // pred_region
          %417 = vst [vmem:[#allocation2] sm:$0xff] 0.0
          %418 = vst [vmem:[#allocation2 + $0x8] sm:$0xff] 0.0
          %419 = vst [vmem:[#allocation2 + $0x10] sm:$0xff] 0.0
          %420 = vst [vmem:[#allocation2 + $0x18] sm:$0xff] 0.0
        $region64: #{tpu_custom_call.1} parent=43 // pred_fallthru
          _
        %v421 = vld [vmem:[#allocation3] sm:$0xff]
        %v422 = vld [vmem:[#allocation3 + $0x8] sm:$0xff]
        %v423 = vld [vmem:[#allocation3 + $0x10] sm:$0xff]
        %v424 = vld [vmem:[#allocation3 + $0x18] sm:$0xff]
        %v425 = vld [vmem:[%s338] sm:$0xff]
        %v426 = vld [vmem:[%s338 + $0x8] sm:$0xff]
        %v427 = vld [vmem:[%s338 + $0x10] sm:$0xff]
        %v428 = vld [vmem:[%s338 + $0x18] sm:$0xff]
        %v429 = vld [vmem:[%s338 + $0x20] sm:$0xff]
        %v430 = vld [vmem:[%s338 + $0x28] sm:$0xff]
        %v431 = vld [vmem:[%s338 + $0x30] sm:$0xff]
        %v432 = vld [vmem:[%s338 + $0x38] sm:$0xff]
        %v433 = vld [vmem:[%s338 + $0x40] sm:$0xff]
        %v434 = vld [vmem:[%s338 + $0x48] sm:$0xff]
        %v435 = vld [vmem:[%s338 + $0x50] sm:$0xff]
        %v436 = vld [vmem:[%s338 + $0x58] sm:$0xff]
        %v437 = vld [vmem:[%s338 + $0x60] sm:$0xff]
        %v438 = vld [vmem:[%s338 + $0x68] sm:$0xff]
        %v439 = vld [vmem:[%s338 + $0x70] sm:$0xff]
        %v440 = vld [vmem:[%s338 + $0x78] sm:$0xff]
        %v441 = vld [vmem:[%s338 + $0x80] sm:$0xff]
        %v442 = vld [vmem:[%s338 + $0x88] sm:$0xff]
        %v443 = vld [vmem:[%s338 + $0x90] sm:$0xff]
        %v444 = vld [vmem:[%s338 + $0x98] sm:$0xff]
        %v445 = vld [vmem:[%s338 + $0xa0] sm:$0xff]
        %v446 = vld [vmem:[%s338 + $0xa8] sm:$0xff]
        %v447 = vld [vmem:[%s338 + $0xb0] sm:$0xff]
        %v448 = vld [vmem:[%s338 + $0xb8] sm:$0xff]
        %v449 = vld [vmem:[%s338 + $0xc0] sm:$0xff]
        %v450 = vld [vmem:[%s338 + $0xc8] sm:$0xff]
        %v451 = vld [vmem:[%s338 + $0xd0] sm:$0xff]
        %v452 = vld [vmem:[%s338 + $0xd8] sm:$0xff]
        %v453 = vld [vmem:[%s338 + $0xe0] sm:$0xff]
        %v454 = vld [vmem:[%s338 + $0xe8] sm:$0xff]
        %v455 = vld [vmem:[%s338 + $0xf0] sm:$0xff]
        %v456 = vld [vmem:[%s338 + $0xf8] sm:$0xff]
        %v457 = vld [vmem:[%s338 + $0x100] sm:$0xff]
        %v458 = vld [vmem:[%s338 + $0x108] sm:$0xff]
        %v459 = vld [vmem:[%s338 + $0x110] sm:$0xff]
        %v460 = vld [vmem:[%s338 + $0x118] sm:$0xff]
        %v461 = vld [vmem:[%s338 + $0x120] sm:$0xff]
        %v462 = vld [vmem:[%s338 + $0x128] sm:$0xff]
        %v463 = vld [vmem:[%s338 + $0x130] sm:$0xff]
        %v464 = vld [vmem:[%s338 + $0x138] sm:$0xff]
        %v465 = vld [vmem:[%s338 + $0x140] sm:$0xff]
        %v466 = vld [vmem:[%s338 + $0x148] sm:$0xff]
        %v467 = vld [vmem:[%s338 + $0x150] sm:$0xff]
        %v468 = vld [vmem:[%s338 + $0x158] sm:$0xff]
        %v469 = vld [vmem:[%s338 + $0x160] sm:$0xff]
        %v470 = vld [vmem:[%s338 + $0x168] sm:$0xff]
        %v471 = vld [vmem:[%s338 + $0x170] sm:$0xff]
        %v472 = vld [vmem:[%s338 + $0x178] sm:$0xff]
        %v473 = vld [vmem:[%s338 + $0x180] sm:$0xff]
        %v474 = vld [vmem:[%s338 + $0x188] sm:$0xff]
        %v475 = vld [vmem:[%s338 + $0x190] sm:$0xff]
        %v476 = vld [vmem:[%s338 + $0x198] sm:$0xff]
        %v477 = vld [vmem:[%s338 + $0x1a0] sm:$0xff]
        %v478 = vld [vmem:[%s338 + $0x1a8] sm:$0xff]
        %v479 = vld [vmem:[%s338 + $0x1b0] sm:$0xff]
        %v480 = vld [vmem:[%s338 + $0x1b8] sm:$0xff]
        %v481 = vld [vmem:[%s338 + $0x1c0] sm:$0xff]
        %v482 = vld [vmem:[%s338 + $0x1c8] sm:$0xff]
        %v483 = vld [vmem:[%s338 + $0x1d0] sm:$0xff]
        %v484 = vld [vmem:[%s338 + $0x1d8] sm:$0xff]
        %v485 = vld [vmem:[%s338 + $0x1e0] sm:$0xff]
        %v486 = vld [vmem:[%s338 + $0x1e8] sm:$0xff]
        %v487 = vld [vmem:[%s338 + $0x1f0] sm:$0xff]
        %v488 = vld [vmem:[%s338 + $0x1f8] sm:$0xff]
        %489 = vmatprep.subr.mxu0 %v456
        %490 = vmatpush1.msra.mxu0 %v455
        %491 = vmatprep.subr.mxu0 %v454
        %492 = vmatpush1.msra.mxu0 %v453
        %493 = vmatprep.subr.mxu0 %v452
        %494 = vmatpush1.msra.mxu0 %v451
        %495 = vmatprep.subr.mxu0 %v450
        %496 = vmatpush1.msra.mxu0 %v449
        %497 = vmatprep.subr.mxu0 %v448
        %498 = vmatpush1.msra.mxu0 %v447
        %499 = vmatprep.subr.mxu0 %v446
        %500 = vmatpush1.msra.mxu0 %v445
        %501 = vmatprep.subr.mxu0 %v444
        %502 = vmatpush1.msra.mxu0 %v443
        %503 = vmatprep.subr.mxu0 %v442
        %504 = vmatpush1.msra.mxu0 %v441
        %505 = vmatprep.subr.mxu0 %v440
        %506 = vmatpush1.msra.mxu0 %v439
        %507 = vmatprep.subr.mxu0 %v438
        %508 = vmatpush1.msra.mxu0 %v437
        %509 = vmatprep.subr.mxu0 %v436
        %510 = vmatpush1.msra.mxu0 %v435
        %511 = vmatprep.subr.mxu0 %v434
        %512 = vmatpush1.msra.mxu0 %v433
        %513 = vmatprep.subr.mxu0 %v432
        %514 = vmatpush1.msra.mxu0 %v431
        %515 = vmatprep.subr.mxu0 %v430
        %516 = vmatpush1.msra.mxu0 %v429
        %517 = vmatprep.subr.mxu0 %v428
        %518 = vmatpush1.msra.mxu0 %v427
        %519 = vmatprep.subr.mxu0 %v426
        %520 = vmatpush1.msra.mxu0 %v425
        %521 = vmatprep.subr.mxu0 %v488
        %522 = vmatpush2.msra.mxu0 %v487
        %523 = vmatprep.subr.mxu0 %v486
        %524 = vmatpush2.msra.mxu0 %v485
        %525 = vmatprep.subr.mxu0 %v484
        %526 = vmatpush2.msra.mxu0 %v483
        %527 = vmatprep.subr.mxu0 %v482
        %528 = vmatpush2.msra.mxu0 %v481
        %529 = vmatprep.subr.mxu0 %v480
        %530 = vmatpush2.msra.mxu0 %v479
        %531 = vmatprep.subr.mxu0 %v478
        %532 = vmatpush2.msra.mxu0 %v477
        %533 = vmatprep.subr.mxu0 %v476
        %534 = vmatpush2.msra.mxu0 %v475
        %535 = vmatprep.subr.mxu0 %v474
        %536 = vmatpush2.msra.mxu0 %v473
        %537 = vmatprep.subr.mxu0 %v472
        %538 = vmatpush2.msra.mxu0 %v471
        %539 = vmatprep.subr.mxu0 %v470
        %540 = vmatpush2.msra.mxu0 %v469
        %541 = vmatprep.subr.mxu0 %v468
        %542 = vmatpush2.msra.mxu0 %v467
        %543 = vmatprep.subr.mxu0 %v466
        %544 = vmatpush2.msra.mxu0 %v465
        %545 = vmatprep.subr.mxu0 %v464
        %546 = vmatpush2.msra.mxu0 %v463
        %547 = vmatprep.subr.mxu0 %v462
        %548 = vmatpush2.msra.mxu0 %v461
        %549 = vmatprep.subr.mxu0 %v460
        %550 = vmatpush2.msra.mxu0 %v459
        %551 = vmatprep.subr.mxu0 %v458
        %552 = vmatpush2.msra.mxu0 %v457
        %553 = vmatprep.mubr.f32.mxu0 %v422
        %554 = vmatmul.mubr.f32.gmra.mxu0 %v421
        %v555 = vpop.f32.mrf.mxu0
        %v556 = vadd.f32 0.0, %v555
        %v557 = vpop.f32.mrf.mxu0
        %v558 = vadd.f32 0.0, %v557
        %559 = vmatprep.mubr.f32.mxu0 %v424
        %560 = vmatmul.mubr.f32.gmra.mxu0 %v423
        %v561 = vpop.f32.mrf.mxu0
        %v562 = vadd.f32 0.0, %v561
        %v563 = vpop.f32.mrf.mxu0
        %v564 = vadd.f32 0.0, %v563
        %565 = vdwg.mxu0
        %v566 = vadd.f32 %v556, %v562
        %v567 = vrot.slane %v566, 4
        %v568 = vadd.f32 %v566, %v567
        %v569 = vrot.slane %v568, 2
        %v570 = vadd.f32 %v568, %v569
        %v571 = vrot.slane %v570, 1
        %v572 = vadd.f32 %v570, %v571
        %v573 = vadd.f32 %v558, %v564
        %v574 = vrot.slane %v573, 4
        %v575 = vadd.f32 %v573, %v574
        %v576 = vrot.slane %v575, 2
        %v577 = vadd.f32 %v575, %v576
        %v578 = vrot.slane %v577, 1
        %v579 = vadd.f32 %v577, %v578
        %v580 = vrcp.pop 16.0
        %v581 = vmul.f32 %v572, %v580
        %v582 = vmul.f32 %v579, %v580
        %v583 = vsub.f32 %v556, %v581
        %v584 = vsub.f32 %v558, %v582
        %v585 = vsub.f32 %v562, %v581
        %v586 = vsub.f32 %v564, %v582
        %v587 = vmul.f32 %v583, %v583
        %v588 = vmul.f32 %v584, %v584
        %v589 = vmul.f32 %v585, %v585
        %v590 = vmul.f32 %v586, %v586
        %v591 = vadd.f32 %v587, %v589
        %v592 = vrot.slane %v591, 4
        %v593 = vadd.f32 %v591, %v592
        %v594 = vrot.slane %v593, 2
        %v595 = vadd.f32 %v593, %v594
        %v596 = vrot.slane %v595, 1
        %v597 = vadd.f32 %v595, %v596
        %v598 = vadd.f32 %v588, %v590
        %v599 = vrot.slane %v598, 4
        %v600 = vadd.f32 %v598, %v599
        %v601 = vrot.slane %v600, 2
        %v602 = vadd.f32 %v600, %v601
        %v603 = vrot.slane %v602, 1
        %v604 = vadd.f32 %v602, %v603
        %v605 = vmul.f32 %v597, %v580
        %v606 = vmul.f32 %v604, %v580
        %v607 = vadd.f32 %v605, 1e-05
        %v608 = vadd.f32 %v606, 1e-05
        %v609 = vrsqrt.pop %v607
        %v610 = vrsqrt.pop %v608
        %v611 = vld [vmem:[%s347] sm:$0x3]
        %v613 = vlaneseq
        %v614 = vshrl.u32 %v613, 7
        %v615 = vsub.s32 0, %v614
        %v616 = vrot.slane %v611, %v615
        %v617 = vlaneseq
        %v618 = vshrl.u32 %v617, 7
        %v619 = vsub.s32 1, %v618
        %v620 = vrot.slane %v611, %v619
        %v623 = vmul.f32 %v609, %v616
        %v624 = vmul.f32 %v610, %v620
        %v625 = vlaneseq
        %v626 = vshrl.u32 %v625, 7
        %v627 = vsub.s32 0, %v626
        %v628 = vrot.slane %v623, %v627
        %v629 = vlaneseq
        %v630 = vshrl.u32 %v629, 7
        %v631 = vsub.s32 0, %v630
        %v632 = vrot.slane %v624, %v631
        %v633 = vmul.f32 %v583, %v628
        %v634 = vmul.f32 %v584, %v632
        %v635 = vmul.f32 %v585, %v628
        %v636 = vmul.f32 %v586, %v632
        %v637 = vld [vmem:[%s403] sm:$0x3]
        %v639 = vlaneseq
        %v640 = vshrl.u32 %v639, 7
        %v641 = vsub.s32 0, %v640
        %v642 = vrot.slane %v637, %v641
        %v643 = vlaneseq
        %v644 = vshrl.u32 %v643, 7
        %v645 = vsub.s32 1, %v644
        %v646 = vrot.slane %v637, %v645
        %v649 = vadd.f32 %v633, %v642
        %v650 = vadd.f32 %v634, %v646
        %v651 = vadd.f32 %v635, %v642
        %v652 = vadd.f32 %v636, %v646
        %v653 = vmax.f32 %v649, 0.0
        %v654 = vmax.f32 %v650, 0.0
        %v655 = vmax.f32 %v651, 0.0
        %v656 = vmax.f32 %v652, 0.0
        %v657 = vld [vmem:[#allocation2] sm:$0xff]
        %v658 = vld [vmem:[#allocation2 + $0x8] sm:$0xff]
        %v659 = vld [vmem:[#allocation2 + $0x10] sm:$0xff]
        %v660 = vld [vmem:[#allocation2 + $0x18] sm:$0xff]
        %v661 = vld [vmem:[%s356] sm:$0xff]
        %v662 = vld [vmem:[%s356 + $0x8] sm:$0xff]
        %v663 = vld [vmem:[%s356 + $0x10] sm:$0xff]
        %v664 = vld [vmem:[%s356 + $0x18] sm:$0xff]
        %v665 = vld [vmem:[%s356 + $0x20] sm:$0xff]
        %v666 = vld [vmem:[%s356 + $0x28] sm:$0xff]
        %v667 = vld [vmem:[%s356 + $0x30] sm:$0xff]
        %v668 = vld [vmem:[%s356 + $0x38] sm:$0xff]
        %v669 = vld [vmem:[%s356 + $0x40] sm:$0xff]
        %v670 = vld [vmem:[%s356 + $0x48] sm:$0xff]
        %v671 = vld [vmem:[%s356 + $0x50] sm:$0xff]
        %v672 = vld [vmem:[%s356 + $0x58] sm:$0xff]
        %v673 = vld [vmem:[%s356 + $0x60] sm:$0xff]
        %v674 = vld [vmem:[%s356 + $0x68] sm:$0xff]
        %v675 = vld [vmem:[%s356 + $0x70] sm:$0xff]
        %v676 = vld [vmem:[%s356 + $0x78] sm:$0xff]
        %v677 = vld [vmem:[%s356 + $0x80] sm:$0xff]
        %v678 = vld [vmem:[%s356 + $0x88] sm:$0xff]
        %v679 = vld [vmem:[%s356 + $0x90] sm:$0xff]
        %v680 = vld [vmem:[%s356 + $0x98] sm:$0xff]
        %v681 = vld [vmem:[%s356 + $0xa0] sm:$0xff]
        %v682 = vld [vmem:[%s356 + $0xa8] sm:$0xff]
        %v683 = vld [vmem:[%s356 + $0xb0] sm:$0xff]
        %v684 = vld [vmem:[%s356 + $0xb8] sm:$0xff]
        %v685 = vld [vmem:[%s356 + $0xc0] sm:$0xff]
        %v686 = vld [vmem:[%s356 + $0xc8] sm:$0xff]
        %v687 = vld [vmem:[%s356 + $0xd0] sm:$0xff]
        %v688 = vld [vmem:[%s356 + $0xd8] sm:$0xff]
        %v689 = vld [vmem:[%s356 + $0xe0] sm:$0xff]
        %v690 = vld [vmem:[%s356 + $0xe8] sm:$0xff]
        %v691 = vld [vmem:[%s356 + $0xf0] sm:$0xff]
        %v692 = vld [vmem:[%s356 + $0xf8] sm:$0xff]
        %v693 = vld [vmem:[%s356 + $0x100] sm:$0xff]
        %v694 = vld [vmem:[%s356 + $0x108] sm:$0xff]
        %v695 = vld [vmem:[%s356 + $0x110] sm:$0xff]
        %v696 = vld [vmem:[%s356 + $0x118] sm:$0xff]
        %v697 = vld [vmem:[%s356 + $0x120] sm:$0xff]
        %v698 = vld [vmem:[%s356 + $0x128] sm:$0xff]
        %v699 = vld [vmem:[%s356 + $0x130] sm:$0xff]
        %v700 = vld [vmem:[%s356 + $0x138] sm:$0xff]
        %v701 = vld [vmem:[%s356 + $0x140] sm:$0xff]
        %v702 = vld [vmem:[%s356 + $0x148] sm:$0xff]
        %v703 = vld [vmem:[%s356 + $0x150] sm:$0xff]
        %v704 = vld [vmem:[%s356 + $0x158] sm:$0xff]
        %v705 = vld [vmem:[%s356 + $0x160] sm:$0xff]
        %v706 = vld [vmem:[%s356 + $0x168] sm:$0xff]
        %v707 = vld [vmem:[%s356 + $0x170] sm:$0xff]
        %v708 = vld [vmem:[%s356 + $0x178] sm:$0xff]
        %v709 = vld [vmem:[%s356 + $0x180] sm:$0xff]
        %v710 = vld [vmem:[%s356 + $0x188] sm:$0xff]
        %v711 = vld [vmem:[%s356 + $0x190] sm:$0xff]
        %v712 = vld [vmem:[%s356 + $0x198] sm:$0xff]
        %v713 = vld [vmem:[%s356 + $0x1a0] sm:$0xff]
        %v714 = vld [vmem:[%s356 + $0x1a8] sm:$0xff]
        %v715 = vld [vmem:[%s356 + $0x1b0] sm:$0xff]
        %v716 = vld [vmem:[%s356 + $0x1b8] sm:$0xff]
        %v717 = vld [vmem:[%s356 + $0x1c0] sm:$0xff]
        %v718 = vld [vmem:[%s356 + $0x1c8] sm:$0xff]
        %v719 = vld [vmem:[%s356 + $0x1d0] sm:$0xff]
        %v720 = vld [vmem:[%s356 + $0x1d8] sm:$0xff]
        %v721 = vld [vmem:[%s356 + $0x1e0] sm:$0xff]
        %v722 = vld [vmem:[%s356 + $0x1e8] sm:$0xff]
        %v723 = vld [vmem:[%s356 + $0x1f0] sm:$0xff]
        %v724 = vld [vmem:[%s356 + $0x1f8] sm:$0xff]
        %725 = vmatprep.subr.mxu0 %v692
        %726 = vmatpush1.msra.mxu0 %v691
        %727 = vmatprep.subr.mxu0 %v690
        %728 = vmatpush1.msra.mxu0 %v689
        %729 = vmatprep.subr.mxu0 %v688
        %730 = vmatpush1.msra.mxu0 %v687
        %731 = vmatprep.subr.mxu0 %v686
        %732 = vmatpush1.msra.mxu0 %v685
        %733 = vmatprep.subr.mxu0 %v684
        %734 = vmatpush1.msra.mxu0 %v683
        %735 = vmatprep.subr.mxu0 %v682
        %736 = vmatpush1.msra.mxu0 %v681
        %737 = vmatprep.subr.mxu0 %v680
        %738 = vmatpush1.msra.mxu0 %v679
        %739 = vmatprep.subr.mxu0 %v678
        %740 = vmatpush1.msra.mxu0 %v677
        %741 = vmatprep.subr.mxu0 %v676
        %742 = vmatpush1.msra.mxu0 %v675
        %743 = vmatprep.subr.mxu0 %v674
        %744 = vmatpush1.msra.mxu0 %v673
        %745 = vmatprep.subr.mxu0 %v672
        %746 = vmatpush1.msra.mxu0 %v671
        %747 = vmatprep.subr.mxu0 %v670
        %748 = vmatpush1.msra.mxu0 %v669
        %749 = vmatprep.subr.mxu0 %v668
        %750 = vmatpush1.msra.mxu0 %v667
        %751 = vmatprep.subr.mxu0 %v666
        %752 = vmatpush1.msra.mxu0 %v665
        %753 = vmatprep.subr.mxu0 %v664
        %754 = vmatpush1.msra.mxu0 %v663
        %755 = vmatprep.subr.mxu0 %v662
        %756 = vmatpush1.msra.mxu0 %v661
        %757 = vmatprep.subr.mxu0 %v724
        %758 = vmatpush2.msra.mxu0 %v723
        %759 = vmatprep.subr.mxu0 %v722
        %760 = vmatpush2.msra.mxu0 %v721
        %761 = vmatprep.subr.mxu0 %v720
        %762 = vmatpush2.msra.mxu0 %v719
        %763 = vmatprep.subr.mxu0 %v718
        %764 = vmatpush2.msra.mxu0 %v717
        %765 = vmatprep.subr.mxu0 %v716
        %766 = vmatpush2.msra.mxu0 %v715
        %767 = vmatprep.subr.mxu0 %v714
        %768 = vmatpush2.msra.mxu0 %v713
        %769 = vmatprep.subr.mxu0 %v712
        %770 = vmatpush2.msra.mxu0 %v711
        %771 = vmatprep.subr.mxu0 %v710
        %772 = vmatpush2.msra.mxu0 %v709
        %773 = vmatprep.subr.mxu0 %v708
        %774 = vmatpush2.msra.mxu0 %v707
        %775 = vmatprep.subr.mxu0 %v706
        %776 = vmatpush2.msra.mxu0 %v705
        %777 = vmatprep.subr.mxu0 %v704
        %778 = vmatpush2.msra.mxu0 %v703
        %779 = vmatprep.subr.mxu0 %v702
        %780 = vmatpush2.msra.mxu0 %v701
        %781 = vmatprep.subr.mxu0 %v700
        %782 = vmatpush2.msra.mxu0 %v699
        %783 = vmatprep.subr.mxu0 %v698
        %784 = vmatpush2.msra.mxu0 %v697
        %785 = vmatprep.subr.mxu0 %v696
        %786 = vmatpush2.msra.mxu0 %v695
        %787 = vmatprep.subr.mxu0 %v694
        %788 = vmatpush2.msra.mxu0 %v693
        %789 = vmatprep.mubr.f32.mxu0 %v654
        %790 = vmatmul.mubr.f32.gmra.mxu0 %v653
        %v791 = vpop.f32.mrf.mxu0
        %v792 = vadd.f32 0.0, %v791
        %v793 = vpop.f32.mrf.mxu0
        %v794 = vadd.f32 0.0, %v793
        %795 = vmatprep.mubr.f32.mxu0 %v656
        %796 = vmatmul.mubr.f32.gmra.mxu0 %v655
        %v797 = vpop.f32.mrf.mxu0
        %v798 = vadd.f32 0.0, %v797
        %v799 = vpop.f32.mrf.mxu0
        %v800 = vadd.f32 0.0, %v799
        %801 = vdwg.mxu0
        %v802 = vadd.f32 %v657, %v792
        %v803 = vadd.f32 %v658, %v794
        %v804 = vadd.f32 %v659, %v798
        %v805 = vadd.f32 %v660, %v800
        %806 = vst [vmem:[#allocation2] sm:$0xff] %v802
        %807 = vst [vmem:[#allocation2 + $0x8] sm:$0xff] %v803
        %808 = vst [vmem:[#allocation2 + $0x10] sm:$0xff] %v804
        %809 = vst [vmem:[#allocation2 + $0x18] sm:$0xff] %v805
        %p810 = scmp.eq.s32.totalorder %s30, 1
        // Predicated region
        $region65: #{tpu_custom_call.1} parent=43 // pred_check
          %p811 = pneg %p810
        $region66: #{tpu_custom_call.1} parent=43 // pred_check_branch
          %813 = sbr.rel (%p811) target = $region68
        $region67: #{tpu_custom_call.1} parent=43 // pred_region
          %v814 = vld [vmem:[#allocation2] sm:$0xff]
          %v815 = vld [vmem:[#allocation2 + $0x8] sm:$0xff]
          %v816 = vld [vmem:[#allocation2 + $0x10] sm:$0xff]
          %v817 = vld [vmem:[#allocation2 + $0x18] sm:$0xff]
          %v818 = vld [vmem:[%s410] sm:$0x3]
          %v820 = vlaneseq
          %v821 = vshrl.u32 %v820, 7
          %v822 = vsub.s32 0, %v821
          %v823 = vrot.slane %v818, %v822
          %v824 = vlaneseq
          %v825 = vshrl.u32 %v824, 7
          %v826 = vsub.s32 1, %v825
          %v827 = vrot.slane %v818, %v826
          %v830 = vadd.f32 %v814, %v823
          %v831 = vadd.f32 %v815, %v827
          %v832 = vadd.f32 %v816, %v823
          %v833 = vadd.f32 %v817, %v827
          %834 = vst [vmem:[#allocation11] sm:$0xff] %v830
          %835 = vst [vmem:[#allocation11 + $0x8] sm:$0xff] %v831
          %836 = vst [vmem:[#allocation11 + $0x10] sm:$0xff] %v832
          %837 = vst [vmem:[#allocation11 + $0x18] sm:$0xff] %v833
        $region68: #{tpu_custom_call.1} parent=43 // pred_fallthru
          _
        // Predicated region
        $region69: #{tpu_custom_call.1} parent=43 // pred_check
          %p838 = pneg %p208
        $region70: #{tpu_custom_call.1} parent=43 // pred_check_branch
          %840 = sbr.rel (%p838) target = $region72
        $region71: #{tpu_custom_call.1} parent=43 // pred_region
          %s841 = smul.u32 2, %s29
          %s843 = ssub.s32 512, 512
          %844 = vsyncadd [#allocation5], %s843
          %s845 = smul.addr %s841, 128
          %s846 = scalar_lea.hbm %s6, %s845
          %s847 = sshll.u32 [#allocation11], 4
          %s848 = int_to_ptr.vmem [resolvable:$true] %s847
          %853 = dma.vmem_to_hbm [thread:$0]  %s848, 512, %s846, [#allocation5], 256, 256, 16
        $region72: #{tpu_custom_call.1} parent=43 // pred_fallthru
          _
        // Predicated region
        $region73: #{tpu_custom_call.1} parent=43 // pred_check
          %p854 = pneg %p208
        $region74: #{tpu_custom_call.1} parent=43 // pred_check_branch
          %856 = sbr.rel (%p854) target = $region76
        $region75: #{tpu_custom_call.1} parent=43 // pred_region
          %857 = dma.done [#allocation5], 512
        $region76: #{tpu_custom_call.1} parent=43 // pred_fallthru
          _
      $region44: #{tpu_custom_call.1} parent=5 // pred_fallthru
        _
      %p858 = scmp.le.s32.totalorder 2, %s20
      // Predicated region
      $region77: #{tpu_custom_call.1} parent=5 // pred_check
        %p859 = pneg %p858
      $region78: #{tpu_custom_call.1} parent=5 // pred_check_branch
        %861 = sbr.rel (%p859) target = $region80
      $region79: #{tpu_custom_call.1} parent=5 // pred_region
        %s862 = ssub.s32 %s20, 2
      $region80: #{tpu_custom_call.1} parent=5 // pred_fallthru
        _
    $region6: #{tpu_custom_call.1} parent=1 // loop_footer
      %s24 = sadd.s32 1, %s20
    $region7: #{tpu_custom_call.1} parent=1 // loop_footer_branch
      %19 = sbr.rel target = $region3
    $region8: #{tpu_custom_call.1} parent=1 // loop_exit
      _
    %863 = vsyncpa [#allocation4], 1
    %s864 = scalar_lea.sflag [#allocation4], 1
    %865 = vsyncpa %s864, 1
    %866 = vsyncpa [#allocation7], 1
    %s867 = scalar_lea.sflag [#allocation7], 1
    %868 = vsyncpa %s867, 1
    %869 = vsyncpa [#allocation10], 1
    %s870 = scalar_lea.sflag [#allocation10], 1
    %871 = vsyncpa %s870, 1
    %872 = vsyncpa [#allocation5], 1
    %s873 = scalar_lea.sflag [#allocation5], 1
    %874 = vsyncpa %s873, 1

</llo_original>
